<compile_context>
chip_gen: v5e
topology: v5e:2x2
jax: 0.10.0
libtpu: 0.0.40
codegen_flags: <defaults>
</compile_context>

<pallas_src>
import functools

import jax
import jax.numpy as jnp
from jax.experimental import pallas as pl
from jax.experimental.pallas import tpu as pltpu

_LANES = 128
_SUBLANES = 8


def _tpu_hw():
    """Best-effort (vmem_capacity_bytes, tensorcores_per_chip) probe."""
    vmem_cap = 64 << 20   # conservative default: v7x per-TensorCore VMEM
    ncores = 1            # conservative default: single TensorCore (v5e/v6e)
    try:
        info = pltpu.get_tpu_info()
    except Exception:
        info = None
    if info is not None:
        try:
            v = int(getattr(info, "vmem_capacity_bytes"))
            if v > 0:
                vmem_cap = v
        except Exception:
            pass
        for name in ("num_tensorcores", "tensorcore_count", "num_cores",
                     "cores_per_chip", "core_count"):
            try:
                c = int(getattr(info, name))
            except Exception:
                continue
            if 2 <= c <= 4:
                ncores = c
                break
    return vmem_cap, ncores


def _input_spec(block_rows, index_map, n_buffers):
    """Input BlockSpec with optional deeper pipelining (pl.Buffered)."""
    if n_buffers is not None and int(n_buffers) != 2:
        try:
            return pl.BlockSpec((block_rows, _LANES), index_map,
                                pipeline_mode=pl.Buffered(int(n_buffers)))
        except TypeError:
            pass  # older BlockSpec signature: fall back to default depth
    return pl.BlockSpec((block_rows, _LANES), index_map)


def _dice_partial_kernel(x_ref, t_ref, acc_ref, *, block_rows, rows,
                         blocks_per_core, need_mask):
    """Accumulate per-lane partial sums of x*t, x, t for this core's rows."""
    c = pl.program_id(0)   # core-split axis
    j = pl.program_id(1)   # reduction axis ("arbitrary")

    @pl.when(j == 0)
    def _init():
        acc_ref[...] = jnp.zeros_like(acc_ref)

    nstrips = block_rows // _SUBLANES

    def accumulate_full():
        # Cast after the DMA so HBM traffic stays in the original dtype.
        x = x_ref[...].astype(jnp.float32)
        t = t_ref[...].astype(jnp.float32)

        def fold(a):
            # (block_rows, 128) -> (8, 128): vreg-aligned VPU adds only; the
            # single cross-lane reduction to scalars happens in the wrapper.
            return jnp.sum(a.reshape(nstrips, _SUBLANES, _LANES), axis=0)

        acc_ref[0, 0] += fold(x * t)   # intersection partials
        acc_ref[0, 1] += fold(x)       # sum(inputs) partials
        acc_ref[0, 2] += fold(t)       # sum(targets) partials

    if not need_mask:
        accumulate_full()
        return

    # Logical (unclamped) first row of this block; rows >= `rows` are padding
    # (ragged tail block or clamped duplicate block) and must contribute zero.
    row0 = (c * blocks_per_core + j) * block_rows
    is_interior = row0 + block_rows <= rows

    @pl.when(is_interior)
    def _fast():
        accumulate_full()

    @pl.when(jnp.logical_not(is_interior))
    def _tail():
        # Cold path: strip-mined masked accumulation over (8,128) sublane
        # strips.  Bounds VMEM temporaries to a few vregs (no block-sized
        # iota/where intermediates) and skips strips that are entirely past
        # `rows` (including fully-clamped duplicate blocks -> 0 iterations).
        nvalid_rows = jnp.maximum(rows - row0, 0)
        nvalid_strips = (nvalid_rows + _SUBLANES - 1) // _SUBLANES

        def body(s, carry):
            acc_xt, acc_x, acc_t = carry
            r0 = pl.multiple_of(s * _SUBLANES, _SUBLANES)
            xs = x_ref[pl.ds(r0, _SUBLANES), :].astype(jnp.float32)
            ts = t_ref[pl.ds(r0, _SUBLANES), :].astype(jnp.float32)
            gid = row0 + r0 + jax.lax.broadcasted_iota(
                jnp.int32, (_SUBLANES, _LANES), 0)
            valid = gid < rows
            zero = jnp.zeros_like(xs)
            xs = jnp.where(valid, xs, zero)
            ts = jnp.where(valid, ts, zero)
            return (acc_xt + xs * ts, acc_x + xs, acc_t + ts)

        z = jnp.zeros((_SUBLANES, _LANES), jnp.float32)
        acc_xt, acc_x, acc_t = jax.lax.fori_loop(0, nvalid_strips, body,
                                                 (z, z, z))
        acc_ref[0, 0] += acc_xt
        acc_ref[0, 1] += acc_x
        acc_ref[0, 2] += acc_t


def dice_loss(inputs, targets, smooth=1.0, *, tile_rows=8192, ncores=None,
              n_buffers=2):
    """Pallas implementation of DiceLoss.forward (no sigmoid, per the module)."""
    x = jnp.ravel(inputs)
    t = jnp.ravel(targets)
    n = x.shape[0]

    # Lane-major 2-D slab.  When n % 128 == 0 (the common case, and the case
    # exercised below) this reshape is a free bitcast -- no HBM copy.
    rem = n % _LANES
    if rem:
        # TODO(synk): avoid this rare-path full pad copy by feeding the raw 1-D
        # array (BoundedSlice / manual DMA) and lane-masking the final block.
        pad = _LANES - rem
        x = jnp.pad(x, (0, pad))
        t = jnp.pad(t, (0, pad))
    rows = x.shape[0] // _LANES
    x2 = x.reshape(rows, _LANES)
    t2 = t.reshape(rows, _LANES)

    vmem_cap, hw_cores = _tpu_hw()
    if ncores is None:
        ncores = hw_cores
    ncores = max(1, int(ncores))
    n_buffers = max(2, int(n_buffers))

    itemsize = x2.dtype.itemsize + t2.dtype.itemsize

    # Block sizing: as large as requested, capped by the row count and by a
    # generation-aware VMEM budget (input pipeline buffers + bounded temps).
    rows_rounded = pl.cdiv(rows, _SUBLANES) * _SUBLANES
    budget = min(int(vmem_cap * 0.6), 48 << 20)
    per_row = n_buffers * _LANES * itemsize + 4 * _LANES * 4
    max_rows = max(_SUBLANES, (budget // per_row) // _SUBLANES * _SUBLANES)
    block_rows = max(_SUBLANES, min(int(tile_rows), rows_rounded, max_rows))
    block_rows -= block_rows % _SUBLANES

    nblocks = pl.cdiv(rows, block_rows)
    ncores = max(1, min(ncores, nblocks))
    blocks_per_core = pl.cdiv(nblocks, ncores)
    if ncores > 1:
        # Contiguous per-core halves: shrink block_rows so the per-core ranges
        # cover `rows` with < one block of overshoot (no fully-duplicated
        # last-block HBM read for realistic sizes).
        block_rows = pl.cdiv(pl.cdiv(rows, ncores * blocks_per_core),
                             _SUBLANES) * _SUBLANES
        nblocks = pl.cdiv(rows, block_rows)
        blocks_per_core = pl.cdiv(nblocks, ncores)

    need_mask = (ncores * blocks_per_core * block_rows) != rows
    last_block = nblocks - 1

    if ncores > 1:
        dim_sem = (pltpu.CORE_PARALLEL, pltpu.ARBITRARY)

        def in_index_map(c, j):
            # Clamp so a (degenerate) fully-out-of-range block re-reads a valid
            # block; its contribution is zeroed by the in-kernel mask.
            return (jnp.minimum(c * blocks_per_core + j, last_block), 0)
    else:
        dim_sem = ("arbitrary", "arbitrary")

        def in_index_map(c, j):
            return (j, 0)

    # Scoped-VMEM limit: n_buffers x (both inputs) + temp allowance + headroom,
    # never above ~90% of this generation's physical VMEM.
    vmem_limit = n_buffers * block_rows * _LANES * itemsize \
        + 4 * block_rows * _LANES * 4 + (8 << 20)
    vmem_limit = int(min(max(vmem_limit, 32 << 20), int(vmem_cap * 0.9)))

    kernel = functools.partial(
        _dice_partial_kernel,
        block_rows=block_rows, rows=rows,
        blocks_per_core=blocks_per_core, need_mask=need_mask)

    bytes_accessed = int(n) * itemsize + ncores * 3 * _SUBLANES * _LANES * 4
    cost = pl.CostEstimate(flops=4 * int(n), transcendentals=0,
                           bytes_accessed=bytes_accessed)

    partials = pl.pallas_call(
        kernel,
        out_shape=jax.ShapeDtypeStruct((ncores, 3, _SUBLANES, _LANES),
                                       jnp.float32),
        grid_spec=pltpu.PrefetchScalarGridSpec(
            num_scalar_prefetch=0,
            grid=(ncores, blocks_per_core),
            in_specs=[
                _input_spec(block_rows, in_index_map, n_buffers),
                _input_spec(block_rows, in_index_map, n_buffers),
            ],
            out_specs=pl.BlockSpec((1, 3, _SUBLANES, _LANES),
                                   lambda c, j: (c, 0, 0, 0)),
        ),
        compiler_params=pltpu.CompilerParams(
            dimension_semantics=dim_sem,
            vmem_limit_bytes=vmem_limit,
        ),
        cost_estimate=cost,
    )(x2, t2)

    # Tiny final reduction (ncores*3*8*128 floats) + dice math in the wrapper.
    sums = jnp.sum(partials, axis=(0, 2, 3))
    inter, sx, st = sums[0], sums[1], sums[2]
    dice = (2.0 * inter + smooth) / (sx + st + smooth)
    return (1.0 - dice).astype(jnp.float32)


def dice_loss_ref(inputs, targets, smooth=1.0):
    x = jnp.ravel(inputs).astype(jnp.float32)
    t = jnp.ravel(targets).astype(jnp.float32)
    inter = jnp.sum(x * t)
    dice = (2.0 * inter + smooth) / (jnp.sum(x) + jnp.sum(t) + smooth)
    return 1.0 - dice


if __name__ == "__main__":
    key = jax.random.PRNGKey(0)
    k1, k2 = jax.random.split(key)

    # Primary check: NCHW segmentation-style shapes (2, 4, 16, 16), f32.
    x = jax.nn.sigmoid(jax.random.normal(k1, (2, 4, 16, 16), dtype=jnp.float32))
    tgt = (jax.random.uniform(k2, (2, 4, 16, 16)) > 0.5).astype(jnp.float32)

    loss = jax.block_until_ready(jax.jit(dice_loss)(x, tgt))
    ref = dice_loss_ref(x, tgt, smooth=1.0)
    assert jnp.allclose(loss, ref, rtol=1e-5, atol=1e-6), (loss, ref)

    # Secondary check: multi-block reduction with a ragged last block, so it
    # exercises the pl.when-gated fast/masked split, the strip-mined tail and
    # the in-kernel dtype cast (bf16 inputs, f32 targets), with tiny tiles.
    k3, k4 = jax.random.split(k1)
    xb = jax.nn.sigmoid(jax.random.normal(k3, (2, 3, 16, 16))).astype(jnp.bfloat16)
    tb = (jax.random.uniform(k4, (2, 3, 16, 16)) > 0.5).astype(jnp.float32)
    loss2 = jax.block_until_ready(
        jax.jit(functools.partial(dice_loss, tile_rows=8))(xb, tb))
    ref2 = dice_loss_ref(xb, tb, smooth=1.0)
    assert jnp.allclose(loss2, ref2, rtol=1e-4, atol=1e-4), (loss2, ref2)

    print("KERNEL_OK")
</pallas_src>

<mosaic_0001>
module attributes {stable_mosaic.version = 11 : i64} {
  func.func @_dice_partial_kernel(%arg0: i32, %arg1: i32, %arg2: memref<16x128xf32, #tpu.memory_space<vmem>>, %arg3: memref<16x128xf32, #tpu.memory_space<vmem>>, %arg4: memref<1x3x8x128xf32, #tpu.memory_space<vmem>>) attributes {dimension_semantics = [#tpu.dimension_semantics<arbitrary>, #tpu.dimension_semantics<arbitrary>], iteration_bounds = array<i64: 1, 1>, scalar_prefetch = 0 : i64, scratch_operands = 0 : i64, tpu.core_type = #tpu.core_type<tc>, window_params = [{transform_indices = @transform_0, window_bounds = array<i64: 16, 128>}, {transform_indices = @transform_1, window_bounds = array<i64: 16, 128>}, {transform_indices = @transform_2, window_bounds = array<i64: 1, 3, 8, 128>}]} {
    %c0_i32 = arith.constant 0 : i32
    %0 = arith.cmpi eq, %arg1, %c0_i32 : i32
    %1 = arith.extui %0 : i1 to i32
    %c0_i32_0 = arith.constant 0 : i32
    %2 = arith.cmpi ne, %1, %c0_i32_0 : i32
    scf.if %2 {
      %cst_28 = arith.constant 0.000000e+00 : f32
      %30 = vector.broadcast %cst_28 : f32 to vector<1x3x8x128xf32>
      %c0_29 = arith.constant 0 : index
      %c0_30 = arith.constant 0 : index
      %c0_31 = arith.constant 0 : index
      %c0_32 = arith.constant 0 : index
      %31 = vector.load %arg4[%c0_29, %c0_30, %c0_31, %c0_32] : memref<1x3x8x128xf32, #tpu.memory_space<vmem>>, vector<1x3x8x128xf32>
      tpu.vector_store %arg4[%c0_29, %c0_30, %c0_31, %c0_32], %30 {strides = array<i32>} : memref<1x3x8x128xf32, #tpu.memory_space<vmem>>, vector<1x3x8x128xf32>,
    } else {
    }
    %c0 = arith.constant 0 : index
    %c0_1 = arith.constant 0 : index
    %3 = vector.load %arg2[%c0, %c0_1] : memref<16x128xf32, #tpu.memory_space<vmem>>, vector<16x128xf32>
    %c0_2 = arith.constant 0 : index
    %c0_3 = arith.constant 0 : index
    %4 = vector.load %arg3[%c0_2, %c0_3] : memref<16x128xf32, #tpu.memory_space<vmem>>, vector<16x128xf32>
    %c0_4 = arith.constant 0 : index
    %c0_5 = arith.constant 0 : index
    %c0_6 = arith.constant 0 : index
    %c0_7 = arith.constant 0 : index
    %5 = vector.load %arg4[%c0_4, %c0_5, %c0_6, %c0_7] : memref<1x3x8x128xf32, #tpu.memory_space<vmem>>, vector<1x1x8x128xf32>
    %6 = vector.shape_cast %5 : vector<1x1x8x128xf32> to vector<8x128xf32>
    %7 = arith.mulf %3, %4 : vector<16x128xf32>
    %8 = vector.shape_cast %7 : vector<16x128xf32> to vector<2x8x128xf32>
    %cst = arith.constant dense<0.000000e+00> : vector<8x128xf32>
    %9 = vector.multi_reduction <add>, %8, %cst [0] : vector<2x8x128xf32> to vector<8x128xf32>
    %10 = arith.addf %6, %9 : vector<8x128xf32>
    %c0_8 = arith.constant 0 : index
    %c0_9 = arith.constant 0 : index
    %c0_10 = arith.constant 0 : index
    %c0_11 = arith.constant 0 : index
    %11 = vector.load %arg4[%c0_8, %c0_9, %c0_10, %c0_11] : memref<1x3x8x128xf32, #tpu.memory_space<vmem>>, vector<1x1x8x128xf32>
    %12 = vector.shape_cast %11 : vector<1x1x8x128xf32> to vector<8x128xf32>
    %13 = vector.shape_cast %10 : vector<8x128xf32> to vector<1x1x8x128xf32>
    tpu.vector_store %arg4[%c0_8, %c0_9, %c0_10, %c0_11], %13 {strides = array<i32>} : memref<1x3x8x128xf32, #tpu.memory_space<vmem>>, vector<1x1x8x128xf32>,
    %c0_12 = arith.constant 0 : index
    %c1 = arith.constant 1 : index
    %c0_13 = arith.constant 0 : index
    %c0_14 = arith.constant 0 : index
    %14 = vector.load %arg4[%c0_12, %c1, %c0_13, %c0_14] : memref<1x3x8x128xf32, #tpu.memory_space<vmem>>, vector<1x1x8x128xf32>
    %15 = vector.shape_cast %14 : vector<1x1x8x128xf32> to vector<8x128xf32>
    %16 = vector.shape_cast %3 : vector<16x128xf32> to vector<2x8x128xf32>
    %cst_15 = arith.constant dense<0.000000e+00> : vector<8x128xf32>
    %17 = vector.multi_reduction <add>, %16, %cst_15 [0] : vector<2x8x128xf32> to vector<8x128xf32>
    %18 = arith.addf %15, %17 : vector<8x128xf32>
    %c0_16 = arith.constant 0 : index
    %c1_17 = arith.constant 1 : index
    %c0_18 = arith.constant 0 : index
    %c0_19 = arith.constant 0 : index
    %19 = vector.load %arg4[%c0_16, %c1_17, %c0_18, %c0_19] : memref<1x3x8x128xf32, #tpu.memory_space<vmem>>, vector<1x1x8x128xf32>
    %20 = vector.shape_cast %19 : vector<1x1x8x128xf32> to vector<8x128xf32>
    %21 = vector.shape_cast %18 : vector<8x128xf32> to vector<1x1x8x128xf32>
    tpu.vector_store %arg4[%c0_16, %c1_17, %c0_18, %c0_19], %21 {strides = array<i32>} : memref<1x3x8x128xf32, #tpu.memory_space<vmem>>, vector<1x1x8x128xf32>,
    %c0_20 = arith.constant 0 : index
    %c2 = arith.constant 2 : index
    %c0_21 = arith.constant 0 : index
    %c0_22 = arith.constant 0 : index
    %22 = vector.load %arg4[%c0_20, %c2, %c0_21, %c0_22] : memref<1x3x8x128xf32, #tpu.memory_space<vmem>>, vector<1x1x8x128xf32>
    %23 = vector.shape_cast %22 : vector<1x1x8x128xf32> to vector<8x128xf32>
    %24 = vector.shape_cast %4 : vector<16x128xf32> to vector<2x8x128xf32>
    %cst_23 = arith.constant dense<0.000000e+00> : vector<8x128xf32>
    %25 = vector.multi_reduction <add>, %24, %cst_23 [0] : vector<2x8x128xf32> to vector<8x128xf32>
    %26 = arith.addf %23, %25 : vector<8x128xf32>
    %c0_24 = arith.constant 0 : index
    %c2_25 = arith.constant 2 : index
    %c0_26 = arith.constant 0 : index
    %c0_27 = arith.constant 0 : index
    %27 = vector.load %arg4[%c0_24, %c2_25, %c0_26, %c0_27] : memref<1x3x8x128xf32, #tpu.memory_space<vmem>>, vector<1x1x8x128xf32>
    %28 = vector.shape_cast %27 : vector<1x1x8x128xf32> to vector<8x128xf32>
    %29 = vector.shape_cast %26 : vector<8x128xf32> to vector<1x1x8x128xf32>
    tpu.vector_store %arg4[%c0_24, %c2_25, %c0_26, %c0_27], %29 {strides = array<i32>} : memref<1x3x8x128xf32, #tpu.memory_space<vmem>>, vector<1x1x8x128xf32>,
    return
  }
  func.func @transform_0(%arg0: i32, %arg1: i32) -> (i32, i32) {
    %c0_i32 = arith.constant 0 : i32
    %c0_i32_0 = arith.constant 0 : i32
    return %arg1, %c0_i32 : i32, i32
  }
  func.func @transform_1(%arg0: i32, %arg1: i32) -> (i32, i32) {
    %c0_i32 = arith.constant 0 : i32
    %c0_i32_0 = arith.constant 0 : i32
    return %arg1, %c0_i32 : i32, i32
  }
  func.func @transform_2(%arg0: i32, %arg1: i32) -> (i32, i32, i32, i32) {
    %c0_i32 = arith.constant 0 : i32
    %c0_i32_0 = arith.constant 0 : i32
    %c0_i32_1 = arith.constant 0 : i32
    %c0_i32_2 = arith.constant 0 : i32
    return %arg0, %c0_i32, %c0_i32_0, %c0_i32_1 : i32, i32, i32, i32
  }
}

</mosaic_0001>

<llo_original>
// kernel: dice_loss.1
$region0: #{dice_loss.1}
  #allocation0 [shape = 'u32[]', space=smem, size = 0x4, offset = 0x4, fixed_abs, tag = 'smem constant byte address 0x4 - core index']
  #allocation1 [shape = 'u32[72,128]{1,0:T(1,128)}', space=vmem, size = 0x9000, scoped, tag = 'internal scratch']
  %s0 = inlined_call_operand.vmem [shape: f32[16,128], index: 0, kind: input, shape index: {}]
  %s1 = inlined_call_operand.vmem [shape: f32[16,128], index: 1, kind: input, shape index: {}]
  %s2 = inlined_call_operand.vmem [shape: f32[1,3,8,128], index: 2, kind: output, shape index: {}]
  %s3 = sld [smem:[#allocation0]]
  $region22: #{dice_loss.1} parent=0
    _
  %s5 = ssub.s32 1, %s3
  %s6 = scalar_select 0, %s5, %s3
  // Predicated region
  $region2: #{dice_loss.1} parent=0 // pred_check
    _
  $region3: #{dice_loss.1} parent=0 // pred_check_branch
    %8 = sbr.rel (0) target = $region5
  $region4: #{dice_loss.1} parent=0 // pred_region
    _
  $region5: #{dice_loss.1} parent=0 // pred_fallthru
    _
  // Predicated region
  $region6: #{dice_loss.1} parent=0 // pred_check
    _
  $region7: #{dice_loss.1} parent=0 // pred_check_branch
    %10 = sbr.rel (0) target = $region9
  $region8: #{dice_loss.1} parent=0 // pred_region
    _
  $region9: #{dice_loss.1} parent=0 // pred_fallthru
    _
  %p11 = scmp.eq.s32.totalorder 0, 0
  // Predicated region
  $region10: #{dice_loss.1} parent=0 // pred_check
    %p12 = pneg %p11
  $region11: #{dice_loss.1} parent=0 // pred_check_branch
    %14 = sbr.rel (%p12) target = $region13
  $region12: #{dice_loss.1} parent=0 // pred_region
    %15 = vst [vmem:[%s2] sm:$0xff] 0.0
    %16 = vst [vmem:[%s2 + $0x8] sm:$0xff] 0.0
    %17 = vst [vmem:[%s2 + $0x10] sm:$0xff] 0.0
  $region13: #{dice_loss.1} parent=0 // pred_fallthru
    _
  %v18 = vld [vmem:[%s0] sm:$0xff]
  %v19 = vld [vmem:[%s0 + $0x8] sm:$0xff]
  %v20 = vld [vmem:[%s1] sm:$0xff]
  %v21 = vld [vmem:[%s1 + $0x8] sm:$0xff]
  %v22 = vld [vmem:[%s2] sm:$0xff]
  %v23 = vmul.f32 %v18, %v20
  %v24 = vmul.f32 %v19, %v21
  %v25 = vadd.f32 %v23, %v24
  %v26 = vadd.f32 %v22, %v25
  %27 = vst [vmem:[%s2] sm:$0xff] %v26
  %s28 = scalar_lea.vmem %s2, 8
  %v29 = vld [vmem:[%s28] sm:$0xff]
  %v30 = vadd.f32 %v18, %v19
  %v31 = vadd.f32 %v29, %v30
  %32 = vst [vmem:[%s28] sm:$0xff] %v31
  %s33 = scalar_lea.vmem %s2, 16
  %v34 = vld [vmem:[%s33] sm:$0xff]
  %v35 = vadd.f32 %v20, %v21
  %v36 = vadd.f32 %v34, %v35
  %37 = vst [vmem:[%s33] sm:$0xff] %v36
  // Predicated region
  $region14: #{dice_loss.1} parent=0 // pred_check
    _
  $region15: #{dice_loss.1} parent=0 // pred_check_branch
    %39 = sbr.rel (0) target = $region17
  $region16: #{dice_loss.1} parent=0 // pred_region
    _
  $region17: #{dice_loss.1} parent=0 // pred_fallthru
    _
  // Predicated region
  $region18: #{dice_loss.1} parent=0 // pred_check
    _
  $region19: #{dice_loss.1} parent=0 // pred_check_branch
    %41 = sbr.rel (0) target = $region21
  $region20: #{dice_loss.1} parent=0 // pred_region
    _
  $region21: #{dice_loss.1} parent=0 // pred_fallthru
    _

</llo_original>
